<compile_context>
chip_gen: v6e
topology: v6e:2x2x1
jax: 0.10.0
libtpu: 0.0.40
codegen_flags: <defaults>
</compile_context>

<pallas_src>
import functools

import jax
import jax.numpy as jnp
from jax.experimental import pallas as pl
from jax.experimental.pallas import tpu as pltpu


def _avrg_loss_kernel(x_ref, o_ref, *, tb, hw, n_rows, bps):
    # x_ref: (TB, row_len) lane-dense VMEM tile; row layout is [ch0 | ch1 | ch2 | ...].
    # o_ref: (1, 1, 1) f32 per-shard accumulator (same block across the inner axis).
    s = pl.program_id(0)  # shard axis ("parallel")
    b = pl.program_id(1)  # batch-block axis within shard ("arbitrary" / reduction)

    @pl.when(b == 0)
    def _():
        o_ref[...] = jnp.zeros_like(o_ref)

    x = x_ref[...].astype(jnp.float32)  # (TB, row_len)

    # |spatial sum| per row per channel; channels are static lane slices of
    # length HW.  The 1/(H*W) scale is applied once in the wrapper.
    per_row = jnp.zeros((tb, 1), jnp.float32)
    for c in range(3):  # unrolled at trace time
        seg = x[:, c * hw:(c + 1) * hw]  # (TB, HW)
        per_row = per_row + jnp.abs(jnp.sum(seg, axis=1, keepdims=True))

    # Mask rows beyond the real batch (remainder block, or a clamped/duplicated
    # block when the shard grid is padded).  Garbage in those rows is dropped
    # by the select and never reaches the accumulator.
    block_start = (s * bps + b) * tb
    row_ids = block_start + jax.lax.broadcasted_iota(jnp.int32, (tb, 1), 0)
    per_row = jnp.where(row_ids < n_rows, per_row, 0.0)

    o_ref[...] += jnp.sum(per_row)


def average_loss(x, *, target_tile_bytes=8 << 20):
    """Pallas implementation of Average_Loss.forward.

    x: (N, C, H, W) with C >= 3.  Returns scalar f32:
       sum over (n, c in 0..2) of | mean_{h,w} x[n, c, h, w] |
    """
    N, C, H, W = x.shape
    assert C >= 3, "Average_Loss expects at least 3 channels"
    HW = H * W
    CHW = C * HW

    # Free, contiguous reshape (no HBM copy): lane-dense rows of length C*H*W.
    x2d = x.reshape(N, CHW)

    # Only channels 0..2 are needed; they are the contiguous prefix of each
    # flattened row.  If that prefix is lane-aligned (or spans the full row),
    # restrict the input block to it so unused channels are never read.
    if C == 3 or (3 * HW) % 128 == 0:
        row_len = 3 * HW
    else:
        row_len = CHW  # fallback: full rows (always a legal full-dim block)

    itemsize = jnp.dtype(x2d.dtype).itemsize
    row_bytes = row_len * itemsize

    # Rows per tile: ~target_tile_bytes per buffer, sublane-aligned (x8) or = N.
    tb = max(1, target_tile_bytes // row_bytes)
    if tb >= N:
        tb = N  # block spans the full batch dim -> no divisibility constraint
    else:
        tb = max(8, (tb // 8) * 8)
        if tb >= N:
            tb = N
    # TODO(synk): for very large H*W (row tiles that overflow VMEM even at 8
    # rows) a third lane-chunk grid axis with per-channel scratch would be
    # needed; not required for typical exposure-loss image sizes.

    num_blocks = pl.cdiv(N, tb)
    num_shards = 2 if num_blocks >= 2 else 1  # 2 TensorCores on v7x
    bps = pl.cdiv(num_blocks, num_shards)     # blocks per shard (grid padded if odd)

    def in_index(s, b):
        # Clamp padded grid steps to a valid block; the kernel masks them to 0.
        bb = jnp.minimum(s * bps + b, num_blocks - 1)
        return (bb, 0)

    tile_bytes = tb * row_bytes
    # Double-buffered input + slack; at least 32 MiB (v5e scoped default is 16 MiB).
    vmem_limit = int(max(32 << 20, 2 * tile_bytes + (2 << 20)))

    kernel = functools.partial(_avrg_loss_kernel, tb=tb, hw=HW, n_rows=N, bps=bps)

    partials = pl.pallas_call(
        kernel,
        out_shape=jax.ShapeDtypeStruct((num_shards, 1, 1), jnp.float32),
        grid_spec=pltpu.PrefetchScalarGridSpec(
            num_scalar_prefetch=0,
            grid=(num_shards, bps),
            in_specs=[pl.BlockSpec((tb, row_len), in_index)],
            out_specs=pl.BlockSpec((1, 1, 1), lambda s, b: (s, 0, 0)),
        ),
        compiler_params=pltpu.CompilerParams(
            dimension_semantics=("parallel", "arbitrary"),
            vmem_limit_bytes=vmem_limit,
        ),
    )(x2d)

    # Single final scale: mean = spatial_sum / (H*W).
    return jnp.sum(partials) * (1.0 / HW)


if __name__ == "__main__":
    key = jax.random.PRNGKey(0)
    # small shapes consistent with the module: batch=2, channels=4, spatial=16
    x = jax.random.normal(key, (2, 4, 16, 16), dtype=jnp.float32)

    loss = average_loss(x)
    jax.block_until_ready(loss)

    # reference check in plain JAX (same semantics as the PyTorch module)
    ref = jnp.sum(jnp.abs(jnp.mean(x[:, 0:3, :, :], axis=(2, 3))))
    assert jnp.allclose(loss, ref, rtol=1e-5, atol=1e-5), (loss, ref)

    print("KERNEL_OK")
</pallas_src>

<mosaic_0001>
module attributes {stable_mosaic.version = 11 : i64} {
  func.func @_avrg_loss_kernel(%arg0: i32, %arg1: i32, %arg2: memref<2x768xf32, #tpu.memory_space<vmem>>, %arg3: memref<1x1x1xf32, #tpu.memory_space<vmem>>) attributes {dimension_semantics = [#tpu.dimension_semantics<parallel>, #tpu.dimension_semantics<arbitrary>], iteration_bounds = array<i64: 1, 1>, scalar_prefetch = 0 : i64, scratch_operands = 0 : i64, tpu.core_type = #tpu.core_type<tc>, window_params = [{transform_indices = @transform_0, window_bounds = array<i64: 2, 768>}, {transform_indices = @transform_1, window_bounds = array<i64: 1, 1, 1>}]} {
    %c0_i32 = arith.constant 0 : i32
    %0 = arith.cmpi eq, %arg1, %c0_i32 : i32
    %1 = arith.extui %0 : i1 to i32
    %c0_i32_0 = arith.constant 0 : i32
    %2 = arith.cmpi ne, %1, %c0_i32_0 : i32
    scf.if %2 {
      %cst_14 = arith.constant 0.000000e+00 : f32
      %38 = vector.broadcast %cst_14 : f32 to vector<1x1x1xf32>
      %c0_15 = arith.constant 0 : index
      %c0_16 = arith.constant 0 : index
      %c0_17 = arith.constant 0 : index
      %39 = vector.load %arg3[%c0_15, %c0_16, %c0_17] : memref<1x1x1xf32, #tpu.memory_space<vmem>>, vector<1x1x1xf32>
      tpu.vector_store %arg3[%c0_15, %c0_16, %c0_17], %38 {strides = array<i32>} : memref<1x1x1xf32, #tpu.memory_space<vmem>>, vector<1x1x1xf32>,
    } else {
    }
    %c0 = arith.constant 0 : index
    %c0_1 = arith.constant 0 : index
    %3 = vector.load %arg2[%c0, %c0_1] : memref<2x768xf32, #tpu.memory_space<vmem>>, vector<2x768xf32>
    %cst = arith.constant 0.000000e+00 : f32
    %4 = vector.broadcast %cst : f32 to vector<2x1xf32>
    %5 = vector.extract_strided_slice %3 {offsets = [0, 0], sizes = [2, 256], strides = [1, 1]} : vector<2x768xf32> to vector<2x256xf32>
    %cst_2 = arith.constant dense<0.000000e+00> : vector<2xf32>
    %6 = vector.multi_reduction <add>, %5, %cst_2 [1] : vector<2x256xf32> to vector<2xf32>
    %7 = vector.shape_cast %6 : vector<2xf32> to vector<2x1xf32>
    %8 = math.absf %7 : vector<2x1xf32>
    %9 = arith.addf %4, %8 : vector<2x1xf32>
    %10 = vector.extract_strided_slice %3 {offsets = [0, 256], sizes = [2, 256], strides = [1, 1]} : vector<2x768xf32> to vector<2x256xf32>
    %cst_3 = arith.constant dense<0.000000e+00> : vector<2xf32>
    %11 = vector.multi_reduction <add>, %10, %cst_3 [1] : vector<2x256xf32> to vector<2xf32>
    %12 = vector.shape_cast %11 : vector<2xf32> to vector<2x1xf32>
    %13 = math.absf %12 : vector<2x1xf32>
    %14 = arith.addf %9, %13 : vector<2x1xf32>
    %15 = vector.extract_strided_slice %3 {offsets = [0, 512], sizes = [2, 256], strides = [1, 1]} : vector<2x768xf32> to vector<2x256xf32>
    %cst_4 = arith.constant dense<0.000000e+00> : vector<2xf32>
    %16 = vector.multi_reduction <add>, %15, %cst_4 [1] : vector<2x256xf32> to vector<2xf32>
    %17 = vector.shape_cast %16 : vector<2xf32> to vector<2x1xf32>
    %18 = math.absf %17 : vector<2x1xf32>
    %19 = arith.addf %14, %18 : vector<2x1xf32>
    %c1_i32 = arith.constant 1 : i32
    %20 = arith.muli %arg0, %c1_i32 : i32
    %21 = arith.addi %20, %arg1 : i32
    %c2_i32 = arith.constant 2 : i32
    %22 = arith.muli %21, %c2_i32 : i32
    %23 = tpu.iota {dimensions = array<i32: 0>} : vector<2x1xi32>
    %24 = vector.broadcast %22 : i32 to vector<2x1xi32>
    %25 = arith.addi %24, %23 : vector<2x1xi32>
    %c2_i32_5 = arith.constant 2 : i32
    %26 = vector.broadcast %c2_i32_5 : i32 to vector<2x1xi32>
    %27 = arith.cmpi slt, %25, %26 : vector<2x1xi32>
    %cst_6 = arith.constant 0.000000e+00 : f32
    %28 = vector.broadcast %cst_6 : f32 to vector<2x1xf32>
    %29 = arith.select %27, %19, %28 : vector<2x1xi1>, vector<2x1xf32>
    %c0_7 = arith.constant 0 : index
    %c0_8 = arith.constant 0 : index
    %c0_9 = arith.constant 0 : index
    %30 = vector.load %arg3[%c0_7, %c0_8, %c0_9] : memref<1x1x1xf32, #tpu.memory_space<vmem>>, vector<1x1x1xf32>
    %31 = vector.shape_cast %29 : vector<2x1xf32> to vector<1x2x1xf32>
    %cst_10 = arith.constant dense<0.000000e+00> : vector<1xf32>
    %32 = vector.multi_reduction <add>, %31, %cst_10 [1, 2] : vector<1x2x1xf32> to vector<1xf32>
    %33 = vector.shape_cast %32 : vector<1xf32> to vector<1x1x1xf32>
    %34 = vector.extract %33[0, 0, 0] : f32 from vector<1x1x1xf32>
    %35 = vector.broadcast %34 : f32 to vector<1x1x1xf32>
    %36 = arith.addf %30, %35 : vector<1x1x1xf32>
    %c0_11 = arith.constant 0 : index
    %c0_12 = arith.constant 0 : index
    %c0_13 = arith.constant 0 : index
    %37 = vector.load %arg3[%c0_11, %c0_12, %c0_13] : memref<1x1x1xf32, #tpu.memory_space<vmem>>, vector<1x1x1xf32>
    tpu.vector_store %arg3[%c0_11, %c0_12, %c0_13], %36 {strides = array<i32>} : memref<1x1x1xf32, #tpu.memory_space<vmem>>, vector<1x1x1xf32>,
    return
  }
  func.func @transform_0(%arg0: i32, %arg1: i32) -> (i32, i32) {
    %c1_i32 = arith.constant 1 : i32
    %0 = arith.muli %arg0, %c1_i32 : i32
    %1 = arith.addi %0, %arg1 : i32
    %c0_i32 = arith.constant 0 : i32
    %2 = arith.minsi %1, %c0_i32 : i32
    %c0_i32_0 = arith.constant 0 : i32
    %c0_i32_1 = arith.constant 0 : i32
    return %2, %c0_i32_0 : i32, i32
  }
  func.func @transform_1(%arg0: i32, %arg1: i32) -> (i32, i32, i32) {
    %c0_i32 = arith.constant 0 : i32
    %c0_i32_0 = arith.constant 0 : i32
    %c0_i32_1 = arith.constant 0 : i32
    return %arg0, %c0_i32, %c0_i32_0 : i32, i32, i32
  }
}

</mosaic_0001>

<llo_original>
// kernel: tpu_custom_call.1
$region0: #{tpu_custom_call.1}
  #allocation0 [shape = 'u32[]', space=smem, size = 0x4, offset = 0x4, fixed_abs, tag = 'smem constant byte address 0x4 - core index']
  #allocation1 [shape = 'u32[144,128]{1,0:T(1,128)}', space=vmem, size = 0x12000, scoped, tag = 'internal scratch']
  %s0 = inlined_call_operand.hbm [shape: f32[2,1024], index: 0, kind: input, shape index: {}]
  %s1 = inlined_call_operand.hbm [shape: f32[1,1,1], index: 1, kind: output, shape index: {}]
  %s2 = sld [smem:[#allocation0]]
  $region22: #{tpu_custom_call.1} parent=0
    _
  %s4 = ssub.s32 1, %s2
  %s5 = scalar_select 0, %s4, %s2
  $region1: #{tpu_custom_call.1} parent=0
    #allocation2 [shape = 'u8[6144]{0}', space=vmem, size = 0x1800, scoped, tag = 'input window, operand 0, single buffered']
    #allocation3 [shape = 's32[1]{0}', space=sflag, size = 0x4, scoped, tag = 'scoped memory for tpu_custom_call.1']
    #allocation4 [shape = 's32[1]{0}', space=sflag, size = 0x4, scoped, tag = 'scoped memory for tpu_custom_call.1']
    #allocation5 [shape = 'u8[512]{0}', space=vmem, size = 0x400, scoped, tag = 'output window, operand 0, single buffered']
    %6 = vsyncpa [#allocation3], 0
    %7 = vsyncpa [#allocation4], 0
    // Predicated region
    $region2: #{tpu_custom_call.1} parent=1 // pred_check
      _
    $region3: #{tpu_custom_call.1} parent=1 // pred_check_branch
      %9 = sbr.rel (0) target = $region5
    $region4: #{tpu_custom_call.1} parent=1 // pred_region
      %s10 = sadd.s32 0, 0
      %p11 = scmp.lt.s32.totalorder %s10, 0
      %s12 = scalar_select %p11, %s10, 0
      %s14 = ssub.s32 192, 192
      %15 = vsyncadd [#allocation3], %s14
      %s16 = smul.addr %s12, 8
      %s17 = smul.addr %s16, 32
      %s18 = scalar_lea.hbm %s0, %s17
      %s20 = sshll.u32 [#allocation2], 4
      %s21 = int_to_ptr.vmem [resolvable:$true] %s20
      %23 = dma.hbm_to_vmem [thread:$0]  %s18, 192, %s21, [#allocation3]
    $region5: #{tpu_custom_call.1} parent=1 // pred_fallthru
      _
    // Predicated region
    $region6: #{tpu_custom_call.1} parent=1 // pred_check
      _
    $region7: #{tpu_custom_call.1} parent=1 // pred_check_branch
      %25 = sbr.rel (0) target = $region9
    $region8: #{tpu_custom_call.1} parent=1 // pred_region
      %26 = dma.done [#allocation3], 192
    $region9: #{tpu_custom_call.1} parent=1 // pred_fallthru
      _
    %s27 = sadd.s32 0, 0
    %p28 = scmp.lt.s32.totalorder %s27, 0
    %s29 = scalar_select %p28, %s27, 0
    %p30 = scmp.eq.s32.totalorder 0, 0
    // Predicated region
    $region10: #{tpu_custom_call.1} parent=1 // pred_check
      %p31 = pneg %p30
    $region11: #{tpu_custom_call.1} parent=1 // pred_check_branch
      %33 = sbr.rel (%p31) target = $region13
    $region12: #{tpu_custom_call.1} parent=1 // pred_region
      %vm34 = vcmask 0
      %35 = vst.msk [vmem:[#allocation5] sm:$0x1] %vm34, 0.0
    $region13: #{tpu_custom_call.1} parent=1 // pred_fallthru
      _
    %v36 = vld [vmem:[#allocation2] sm:$0xff]
    %v37 = vld [vmem:[#allocation2 + $0x8] sm:$0xf]
    %v40 = vunpack.c.l.s4 1983009808
    %v41 = vunpack.c.0.s8 %v40
    %v42 = vlaneseq
    %v43 = vshrl.u32 %v42, 7
    %v44 = vsub.s32 %v41, %v43
    %v45 = vrot.slane %v36, %v44
    %v46 = vcombine.high %v45, %v45
    %vm49 = vcmask 1041408
    %v50 = vsel %vm49, %v45, 0.0
    %v51 = vsel %vm49, %v46, 0.0
    %v52 = vadd.f32 %v50, %v51
    %53 = vadd.xlane.f32.xlu0 %v52
    %v54 = vpop.xlane.xlu0 %53
    %v55 = vand.u32 2147483647, %v54
    %v56 = vadd.f32 %v55, 0.0
    %v57 = vcombine.high %v36, %v36
    %v59 = vunpack.c.l.s4 1983009808
    %v60 = vunpack.c.0.s8 %v59
    %v61 = vlaneseq
    %v62 = vshrl.u32 %v61, 7
    %v63 = vsub.s32 %v60, %v62
    %v64 = vrot.slane %v57, %v63
    %v65 = vcombine.high %v64, %v64
    %v68 = vsel %vm49, %v64, 0.0
    %v69 = vsel %vm49, %v65, 0.0
    %v70 = vadd.f32 %v68, %v69
    %71 = vadd.xlane.f32.xlu0 %v70
    %v72 = vpop.xlane.xlu0 %71
    %v73 = vand.u32 2147483647, %v72
    %v74 = vadd.f32 %v56, %v73
    %v77 = vunpack.c.l.s4 1983009808
    %v78 = vunpack.c.0.s8 %v77
    %v79 = vlaneseq
    %v80 = vshrl.u32 %v79, 7
    %v81 = vsub.s32 %v78, %v80
    %v82 = vrot.slane %v37, %v81
    %v83 = vcombine.high %v82, %v82
    %v86 = vsel %vm49, %v82, 0.0
    %v87 = vsel %vm49, %v83, 0.0
    %v88 = vadd.f32 %v86, %v87
    %89 = vadd.xlane.f32.xlu0 %v88
    %v90 = vpop.xlane.xlu0 %89
    %v91 = vand.u32 2147483647, %v90
    %v92 = vadd.f32 %v74, %v91
    %s93 = sadd.s32 0, 0
    %s94 = smul.u32 %s93, 2
    %v95 = vlaneseq
    %v96 = vshrl.u32 %v95, 7
    %v97 = vstv %s94
    %v98 = vadd.s32 %v97, %v96
    %vm99 = vcmp.lt.s32.totalorder %v98, 2
    %v100 = vsel %vm99, %v92, 0.0
    %v101 = vld [vmem:[#allocation5] sm:$0x1]
    %vm102 = vcmask 1024
    %v103 = vsel %vm102, %v100, 0.0
    %104 = vadd.xlane.f32.xlu0 %v103
    %v105 = vpop.xlane.xlu0 %104
    %v106 = vrot.slane %v105, 4
    %v107 = vadd.f32 %v105, %v106
    %v108 = vrot.slane %v107, 2
    %v109 = vadd.f32 %v107, %v108
    %v110 = vrot.slane %v109, 1
    %v111 = vadd.f32 %v109, %v110
    %s112 = vtos %v111
    %v113 = vstv %s112
    %v114 = vadd.f32 %v101, %v113
    %vm115 = vcmask 0
    %116 = vst.msk [vmem:[#allocation5] sm:$0x1] %vm115, %v114
    // Predicated region
    $region14: #{tpu_custom_call.1} parent=1 // pred_check
      _
    $region15: #{tpu_custom_call.1} parent=1 // pred_check_branch
      %118 = sbr.rel (0) target = $region17
    $region16: #{tpu_custom_call.1} parent=1 // pred_region
      %s120 = ssub.s32 16, 16
      %121 = vsyncadd [#allocation4], %s120
      %s123 = sshll.u32 [#allocation5], 4
      %s124 = int_to_ptr.vmem [resolvable:$true] %s123
      %126 = dma.vmem_to_hbm [thread:$0]  %s124, 16, %s1, [#allocation4]
    $region17: #{tpu_custom_call.1} parent=1 // pred_fallthru
      _
    // Predicated region
    $region18: #{tpu_custom_call.1} parent=1 // pred_check
      _
    $region19: #{tpu_custom_call.1} parent=1 // pred_check_branch
      %128 = sbr.rel (0) target = $region21
    $region20: #{tpu_custom_call.1} parent=1 // pred_region
      %129 = dma.done [#allocation4], 16
    $region21: #{tpu_custom_call.1} parent=1 // pred_fallthru
      _
    %130 = vsyncpa [#allocation3], 1
    %131 = vsyncpa [#allocation4], 1

</llo_original>
